<compile_context>
chip_gen: v7x
topology: tpu7x:2x2x1
jax: 0.10.0
libtpu: 0.0.40
codegen_flags: <defaults>
</compile_context>

<pallas_src>
import jax
import jax.numpy as jnp
from jax.experimental import pallas as pl
from jax.experimental.pallas import tpu as pltpu


def _sa_block_kernel(xf_ref, xq_ref, wvk_ref, bvk_ref, wqt_ref, bq_ref,
                     gamma_ref, out_ref):
    """One (batch, query-block) tile of SA_Block, fully fused.

    xf_ref:   (1, C, HW)    full feature map of this batch element
    xq_ref:   (1, C, TQ)    query-block columns of the same feature map
    wvk_ref:  (C + C8, C)   stacked [value; key] 1x1-conv weights
    bvk_ref:  (C + C8, 1)   stacked [value; key] biases (column, lane-broadcast)
    wqt_ref:  (C, C8)       query weight, pre-transposed for (TQ,C)@(C,C8)
    bq_ref:   (1, C8)       query bias (row, sublane-broadcast)
    gamma_ref:(1,) f32      SMEM scalar
    out_ref:  (1, C, TQ)
    """
    C = xf_ref.shape[1]

    xb = xf_ref[0]                                    # (C, HW)  f32
    x_q = xq_ref[0]                                   # (C, TQ)  f32
    xb_bf = xb.astype(jnp.bfloat16)

    # Fused V+K projection: one MXU weight push, one pass over x.  (C+C8, HW)
    vk = jnp.dot(wvk_ref[...].astype(jnp.bfloat16), xb_bf,
                 preferred_element_type=jnp.float32) + bvk_ref[...]
    v = vk[:C, :]                                     # (C,  HW)  sublane-aligned
    k = vk[C:, :]                                     # (C8, HW)  sublane-aligned

    # Q projection for this query block only, already in (TQ, C8) layout.
    xt_q = x_q.T.astype(jnp.bfloat16)                 # (TQ, C)   small transpose
    q = jnp.dot(xt_q, wqt_ref[...].astype(jnp.bfloat16),
                preferred_element_type=jnp.float32) + bq_ref[...]   # (TQ, C8)

    # energy[i, j] = sum_c q[c, i] * k[c, j]  -> canonical (TQ,C8)@(C8,HW) matmul.
    energy = jnp.dot(q.astype(jnp.bfloat16), k.astype(jnp.bfloat16),
                     preferred_element_type=jnp.float32)            # (TQ, HW)

    # Un-normalized, max-stabilized softmax (f32 elementwise, EUP exp).
    m = jnp.max(energy, axis=-1, keepdims=True)
    p = jnp.exp(energy - m)                                         # (TQ, HW)
    s = jnp.sum(p, axis=-1, keepdims=True)                          # (TQ, 1)

    # out_t = p @ v^T in canonical layout: transpose the SMALL (C,HW) value map
    # once instead of the (HW,HW) attention matrix.
    v_t = v.T.astype(jnp.bfloat16)                                  # (HW, C)
    out_t = jnp.dot(p.astype(jnp.bfloat16), v_t,
                    preferred_element_type=jnp.float32)             # (TQ, C)

    # Fold softmax normalization + gamma into one per-row scale (EUP reciprocal;
    # replaces HW*HW divides).
    scale = gamma_ref[0] * pl.reciprocal(s, approx=True)            # (TQ, 1)

    # Small transpose back to lane-dense (C, TQ), then residual add.
    out_ref[0] = ((out_t * scale).T + x_q).astype(out_ref.dtype)


def sa_block(x, wq, bq, wk, bk, wv, bv, gamma):
    """Forward pass of SA_Block.

    x:     (B, C, H, W) float32 NCHW
    wq/wk: (C//8, C, 1, 1), bq/bk: (C//8,)
    wv:    (C, C, 1, 1),    bv:    (C,)
    gamma: (1,)
    returns (B, C, H, W)
    """
    B, C, H, W = x.shape
    HW = H * W
    C8 = wq.shape[0]

    # Query-block size: 128 lanes when possible (v7x gets >=2 parallel steps even
    # for B == 1), otherwise the full pixel axis.
    TQ = 128 if (HW % 128 == 0 and HW > 128) else HW
    NQ = HW // TQ

    x_flat = x.reshape(B, C, HW)              # zero-copy: NCHW contiguous in H*W

    wq2 = wq[:, :, 0, 0]
    wk2 = wk[:, :, 0, 0]
    wv2 = wv[:, :, 0, 0]
    # Stacked [value; key] weights/biases (value first -> both slices vreg-aligned).
    w_vk = jnp.concatenate([wv2, wk2], axis=0)            # (C + C8, C)
    b_vk = jnp.concatenate([bv, bk]).reshape(C + C8, 1)   # column bias
    wq_t = wq2.T                                          # (C, C8)
    bq_row = bq.reshape(1, C8)                            # row bias

    flops = 2 * B * ((C + C8) * C * HW      # fused V/K projection
                     + C8 * C * HW          # Q projection (summed over blocks)
                     + C8 * HW * HW         # energy
                     + C * HW * HW)         # p @ v^T
    transcendentals = B * (HW * HW + HW)    # exp + reciprocal
    bytes_accessed = (2 * B * C * HW * 4                      # x in, out
                      + 4 * ((C + C8) * C + C * C8 + C + 2 * C8 + 1))

    out_flat = pl.pallas_call(
        _sa_block_kernel,
        out_shape=jax.ShapeDtypeStruct((B, C, HW), x.dtype),
        grid=(B, NQ),
        in_specs=[
            pl.BlockSpec((1, C, HW), lambda b, q: (b, 0, 0)),   # x (full, for K/V)
            pl.BlockSpec((1, C, TQ), lambda b, q: (b, 0, q)),   # x (query block)
            pl.BlockSpec((C + C8, C), lambda b, q: (0, 0)),     # stacked Wv/Wk
            pl.BlockSpec((C + C8, 1), lambda b, q: (0, 0)),     # stacked bv/bk
            pl.BlockSpec((C, C8), lambda b, q: (0, 0)),         # Wq^T
            pl.BlockSpec((1, C8), lambda b, q: (0, 0)),         # bq row
            pl.BlockSpec(memory_space=pltpu.MemorySpace.SMEM),  # gamma scalar
        ],
        out_specs=pl.BlockSpec((1, C, TQ), lambda b, q: (b, 0, q)),
        compiler_params=pltpu.CompilerParams(
            dimension_semantics=("parallel", "parallel"),   # batch x query blocks
            vmem_limit_bytes=32 * 1024 * 1024),
        cost_estimate=pl.CostEstimate(flops=flops,
                                      transcendentals=transcendentals,
                                      bytes_accessed=bytes_accessed),
    )(x_flat, x_flat, w_vk, b_vk, wq_t, bq_row, gamma)

    return out_flat.reshape(B, C, H, W)


def _reference(x, wq, bq, wk, bk, wv, bv, gamma):
    """Pure-JAX (f32) reference mirroring the PyTorch forward."""
    B, C, H, W = x.shape
    HW = H * W
    xf = x.reshape(B, C, HW)
    wq2, wk2, wv2 = wq[:, :, 0, 0], wk[:, :, 0, 0], wv[:, :, 0, 0]
    q = jnp.einsum("oc,bcn->bon", wq2, xf) + bq[None, :, None]   # (B, C8, HW)
    k = jnp.einsum("oc,bcn->bon", wk2, xf) + bk[None, :, None]   # (B, C8, HW)
    v = jnp.einsum("oc,bcn->bon", wv2, xf) + bv[None, :, None]   # (B, C,  HW)
    energy = jnp.einsum("bci,bcj->bij", q, k)                    # (B, HW, HW)
    attn = jax.nn.softmax(energy, axis=-1)
    out = jnp.einsum("bcj,bij->bci", v, attn)                    # (B, C, HW)
    out = out.reshape(B, C, H, W)
    return gamma * out + x


if __name__ == "__main__":
    key = jax.random.PRNGKey(0)
    ks = jax.random.split(key, 8)

    B, C, H, W = 2, 32, 16, 16      # in_dim=32 so C//8 = 4
    C8 = C // 8

    x = jax.random.normal(ks[0], (B, C, H, W), jnp.float32)

    # Conv2d default-style init: U(-1/sqrt(fan_in), 1/sqrt(fan_in)), fan_in = C.
    bound = 1.0 / (C ** 0.5)
    wq = jax.random.uniform(ks[1], (C8, C, 1, 1), jnp.float32, -bound, bound)
    bq = jax.random.uniform(ks[2], (C8,), jnp.float32, -bound, bound)
    wk = jax.random.uniform(ks[3], (C8, C, 1, 1), jnp.float32, -bound, bound)
    bk = jax.random.uniform(ks[4], (C8,), jnp.float32, -bound, bound)
    wv = jax.random.uniform(ks[5], (C, C, 1, 1), jnp.float32, -bound, bound)
    bv = jax.random.uniform(ks[6], (C,), jnp.float32, -bound, bound)
    gamma = jnp.ones((1,), jnp.float32)          # nn.Parameter(torch.ones(1))

    out = jax.block_until_ready(sa_block(x, wq, bq, wk, bk, wv, bv, gamma))
    ref = _reference(x, wq, bq, wk, bk, wv, bv, gamma)

    assert out.shape == (B, C, H, W), out.shape
    max_diff = float(jnp.max(jnp.abs(out - ref)))
    # bf16 MXU operands + approx reciprocal -> slightly looser tolerance than f32.
    assert jnp.allclose(out, ref, atol=1e-1, rtol=1e-2), (
        "mismatch vs reference, max abs diff = %e" % max_diff)
    print("KERNEL_OK")
</pallas_src>

<mosaic_0001>
module attributes {stable_mosaic.version = 11 : i64} {
  func.func @_sa_block_kernel(%arg0: i32, %arg1: i32, %arg2: memref<1x32x256xf32, #tpu.memory_space<vmem>>, %arg3: memref<1x32x128xf32, #tpu.memory_space<vmem>>, %arg4: memref<36x32xf32, #tpu.memory_space<vmem>>, %arg5: memref<36x1xf32, #tpu.memory_space<vmem>>, %arg6: memref<32x4xf32, #tpu.memory_space<vmem>>, %arg7: memref<1x4xf32, #tpu.memory_space<vmem>>, %arg8: memref<1xf32, #tpu.memory_space<smem>>, %arg9: memref<1x32x128xf32, #tpu.memory_space<vmem>>) attributes {dimension_semantics = [#tpu.dimension_semantics<parallel>, #tpu.dimension_semantics<parallel>], iteration_bounds = array<i64: 2, 2>, scalar_prefetch = 0 : i64, scratch_operands = 0 : i64, tpu.core_type = #tpu.core_type<tc>, window_params = [{transform_indices = @transform_0, window_bounds = array<i64: 1, 32, 256>}, {transform_indices = @transform_1, window_bounds = array<i64: 1, 32, 128>}, {pipeline_mode = #tpu.pipeline_mode<synchronous>, transform_indices = @transform_2, window_bounds = array<i64: 36, 32>}, {pipeline_mode = #tpu.pipeline_mode<synchronous>, transform_indices = @transform_3, window_bounds = array<i64: 36, 1>}, {pipeline_mode = #tpu.pipeline_mode<synchronous>, transform_indices = @transform_4, window_bounds = array<i64: 32, 4>}, {pipeline_mode = #tpu.pipeline_mode<synchronous>, transform_indices = @transform_5, window_bounds = array<i64: 1, 4>}, {transform_indices = @transform_6, window_bounds = array<i64: 1>}, {transform_indices = @transform_7, window_bounds = array<i64: 1, 32, 128>}]} {
    %c0 = arith.constant 0 : index
    %c0_0 = arith.constant 0 : index
    %c0_1 = arith.constant 0 : index
    %0 = vector.load %arg2[%c0, %c0_0, %c0_1] : memref<1x32x256xf32, #tpu.memory_space<vmem>>, vector<1x32x256xf32>
    %1 = vector.shape_cast %0 : vector<1x32x256xf32> to vector<32x256xf32>
    %c0_2 = arith.constant 0 : index
    %c0_3 = arith.constant 0 : index
    %c0_4 = arith.constant 0 : index
    %2 = vector.load %arg3[%c0_2, %c0_3, %c0_4] : memref<1x32x128xf32, #tpu.memory_space<vmem>>, vector<1x32x128xf32>
    %3 = vector.shape_cast %2 : vector<1x32x128xf32> to vector<32x128xf32>
    %4 = arith.truncf %1 : vector<32x256xf32> to vector<32x256xbf16>
    %c0_5 = arith.constant 0 : index
    %c0_6 = arith.constant 0 : index
    %5 = vector.load %arg4[%c0_5, %c0_6] : memref<36x32xf32, #tpu.memory_space<vmem>>, vector<36x32xf32>
    %6 = arith.truncf %5 : vector<36x32xf32> to vector<36x32xbf16>
    %cst = arith.constant dense<0.000000e+00> : vector<36x256xf32>
    %7 = tpu.matmul %6, %4, %cst {dimension_numbers = #tpu.dot_dimension_numbers<[1], [0], [0], [1], [0, 0, 1, 1], [], []>} : vector<36x32xbf16>, vector<32x256xbf16>, vector<36x256xf32> -> vector<36x256xf32>
    %c0_7 = arith.constant 0 : index
    %c0_8 = arith.constant 0 : index
    %8 = vector.load %arg5[%c0_7, %c0_8] : memref<36x1xf32, #tpu.memory_space<vmem>>, vector<36x1xf32>
    %9 = vector.broadcast %8 : vector<36x1xf32> to vector<36x256xf32>
    %10 = arith.addf %7, %9 : vector<36x256xf32>
    %11 = vector.extract_strided_slice %10 {offsets = [0, 0], sizes = [32, 256], strides = [1, 1]} : vector<36x256xf32> to vector<32x256xf32>
    %12 = vector.extract_strided_slice %10 {offsets = [32, 0], sizes = [4, 256], strides = [1, 1]} : vector<36x256xf32> to vector<4x256xf32>
    %13 = tpu.transpose %3, [1, 0] : vector<32x128xf32> -> vector<128x32xf32>
    %14 = arith.truncf %13 : vector<128x32xf32> to vector<128x32xbf16>
    %c0_9 = arith.constant 0 : index
    %c0_10 = arith.constant 0 : index
    %15 = vector.load %arg6[%c0_9, %c0_10] : memref<32x4xf32, #tpu.memory_space<vmem>>, vector<32x4xf32>
    %16 = arith.truncf %15 : vector<32x4xf32> to vector<32x4xbf16>
    %cst_11 = arith.constant dense<0.000000e+00> : vector<128x4xf32>
    %17 = tpu.matmul %14, %16, %cst_11 {dimension_numbers = #tpu.dot_dimension_numbers<[1], [0], [0], [1], [0, 0, 1, 1], [], []>} : vector<128x32xbf16>, vector<32x4xbf16>, vector<128x4xf32> -> vector<128x4xf32>
    %c0_12 = arith.constant 0 : index
    %c0_13 = arith.constant 0 : index
    %18 = vector.load %arg7[%c0_12, %c0_13] : memref<1x4xf32, #tpu.memory_space<vmem>>, vector<1x4xf32>
    %19 = vector.broadcast %18 : vector<1x4xf32> to vector<128x4xf32>
    %20 = arith.addf %17, %19 : vector<128x4xf32>
    %21 = arith.truncf %20 : vector<128x4xf32> to vector<128x4xbf16>
    %22 = arith.truncf %12 : vector<4x256xf32> to vector<4x256xbf16>
    %cst_14 = arith.constant dense<0.000000e+00> : vector<128x256xf32>
    %23 = tpu.matmul %21, %22, %cst_14 {dimension_numbers = #tpu.dot_dimension_numbers<[1], [0], [0], [1], [0, 0, 1, 1], [], []>} : vector<128x4xbf16>, vector<4x256xbf16>, vector<128x256xf32> -> vector<128x256xf32>
    %cst_15 = arith.constant dense<0xFF800000> : vector<128xf32>
    %24 = vector.multi_reduction <maximumf>, %23, %cst_15 [1] : vector<128x256xf32> to vector<128xf32>
    %25 = vector.shape_cast %24 : vector<128xf32> to vector<128x1xf32>
    %26 = vector.broadcast %25 : vector<128x1xf32> to vector<128x256xf32>
    %27 = arith.subf %23, %26 : vector<128x256xf32>
    %28 = math.exp %27 : vector<128x256xf32>
    %cst_16 = arith.constant dense<0.000000e+00> : vector<128xf32>
    %29 = vector.multi_reduction <add>, %28, %cst_16 [1] : vector<128x256xf32> to vector<128xf32>
    %30 = vector.shape_cast %29 : vector<128xf32> to vector<128x1xf32>
    %31 = tpu.transpose %11, [1, 0] : vector<32x256xf32> -> vector<256x32xf32>
    %32 = arith.truncf %31 : vector<256x32xf32> to vector<256x32xbf16>
    %33 = arith.truncf %28 : vector<128x256xf32> to vector<128x256xbf16>
    %cst_17 = arith.constant dense<0.000000e+00> : vector<128x32xf32>
    %34 = tpu.matmul %33, %32, %cst_17 {dimension_numbers = #tpu.dot_dimension_numbers<[1], [0], [0], [1], [0, 0, 1, 1], [], []>} : vector<128x256xbf16>, vector<256x32xbf16>, vector<128x32xf32> -> vector<128x32xf32>
    %c0_18 = arith.constant 0 : index
    %35 = memref.load %arg8[%c0_18] : memref<1xf32, #tpu.memory_space<smem>>
    %36 = tpu.reciprocal %30 {approx = true} : vector<128x1xf32> -> vector<128x1xf32>
    %37 = vector.broadcast %35 : f32 to vector<128x1xf32>
    %38 = arith.mulf %37, %36 : vector<128x1xf32>
    %39 = vector.broadcast %38 : vector<128x1xf32> to vector<128x32xf32>
    %40 = arith.mulf %34, %39 : vector<128x32xf32>
    %41 = tpu.transpose %40, [1, 0] : vector<128x32xf32> -> vector<32x128xf32>
    %42 = arith.addf %41, %3 : vector<32x128xf32>
    %c0_19 = arith.constant 0 : index
    %c0_20 = arith.constant 0 : index
    %c0_21 = arith.constant 0 : index
    %43 = vector.load %arg9[%c0_19, %c0_20, %c0_21] : memref<1x32x128xf32, #tpu.memory_space<vmem>>, vector<1x32x128xf32>
    %44 = vector.shape_cast %43 : vector<1x32x128xf32> to vector<32x128xf32>
    %45 = vector.shape_cast %42 : vector<32x128xf32> to vector<1x32x128xf32>
    tpu.vector_store %arg9[%c0_19, %c0_20, %c0_21], %45 {strides = array<i32>} : memref<1x32x128xf32, #tpu.memory_space<vmem>>, vector<1x32x128xf32>,
    return
  }
  func.func @transform_0(%arg0: i32, %arg1: i32) -> (i32, i32, i32) {
    %c0_i32 = arith.constant 0 : i32
    %c0_i32_0 = arith.constant 0 : i32
    %c0_i32_1 = arith.constant 0 : i32
    return %arg0, %c0_i32, %c0_i32_0 : i32, i32, i32
  }
  func.func @transform_1(%arg0: i32, %arg1: i32) -> (i32, i32, i32) {
    %c0_i32 = arith.constant 0 : i32
    %c0_i32_0 = arith.constant 0 : i32
    return %arg0, %c0_i32, %arg1 : i32, i32, i32
  }
  func.func @transform_2(%arg0: i32, %arg1: i32) -> (i32, i32) {
    %c0_i32 = arith.constant 0 : i32
    %c0_i32_0 = arith.constant 0 : i32
    %c0_i32_1 = arith.constant 0 : i32
    return %c0_i32, %c0_i32_0 : i32, i32
  }
  func.func @transform_3(%arg0: i32, %arg1: i32) -> (i32, i32) {
    %c0_i32 = arith.constant 0 : i32
    %c0_i32_0 = arith.constant 0 : i32
    %c0_i32_1 = arith.constant 0 : i32
    return %c0_i32, %c0_i32_0 : i32, i32
  }
  func.func @transform_4(%arg0: i32, %arg1: i32) -> (i32, i32) {
    %c0_i32 = arith.constant 0 : i32
    %c0_i32_0 = arith.constant 0 : i32
    %c0_i32_1 = arith.constant 0 : i32
    return %c0_i32, %c0_i32_0 : i32, i32
  }
  func.func @transform_5(%arg0: i32, %arg1: i32) -> (i32, i32) {
    %c0_i32 = arith.constant 0 : i32
    %c0_i32_0 = arith.constant 0 : i32
    %c0_i32_1 = arith.constant 0 : i32
    return %c0_i32, %c0_i32_0 : i32, i32
  }
  func.func @transform_6(%arg0: i32, %arg1: i32) -> i32 {
    %c0_i32 = arith.constant 0 : i32
    %c0_i32_0 = arith.constant 0 : i32
    return %c0_i32 : i32
  }
  func.func @transform_7(%arg0: i32, %arg1: i32) -> (i32, i32, i32) {
    %c0_i32 = arith.constant 0 : i32
    %c0_i32_0 = arith.constant 0 : i32
    return %arg0, %c0_i32, %arg1 : i32, i32, i32
  }
}

</mosaic_0001>

<llo_original>
// kernel: tpu_custom_call.1
$region0: #{tpu_custom_call.1}
  #allocation0 [shape = 'u32[]', space=smem, size = 0x4, offset = 0x4, fixed_abs, tag = 'smem constant byte address 0x4 - core index']
  #allocation1 [shape = 'u32[144,128]{1,0:T(1,128)}', space=vmem, size = 0x12000, scoped, tag = 'internal scratch']
  #allocation2 [shape = 'f32[1]{0:T(128)S(6)}', space=smem, size = 0x200, scoped, tag = 'scoped memory for tpu_custom_call.1']
  %s0 = inlined_call_operand.vmem [shape: f32[2,32,256], index: 0, kind: input, shape index: {}]
  %s1 = inlined_call_operand.hbm [shape: f32[2,32,256], index: 1, kind: input, shape index: {}]
  %s2 = inlined_call_operand.vmem [shape: f32[36,32], index: 2, kind: input, shape index: {}]
  %s3 = inlined_call_operand.vmem [shape: f32[36,1], index: 3, kind: input, shape index: {}]
  %s4 = inlined_call_operand.vmem [shape: f32[32,4], index: 4, kind: input, shape index: {}]
  %s5 = inlined_call_operand.vmem [shape: f32[1,4], index: 5, kind: input, shape index: {}]
  %s6 = inlined_call_operand.<no memory space> [shape: f32[1], index: 6, kind: input, shape index: {}]
  %s7 = inlined_call_operand.hbm [shape: f32[2,32,256], index: 7, kind: output, shape index: {}]
  %s8 = sld [smem:[#allocation0]]
  $region65: #{tpu_custom_call.1} parent=0
    _
  %s10 = ssub.s32 1, %s8
  %s11 = scalar_select 0, %s10, %s8
  %12 = sst [smem:[#allocation2]] %s6
  $region1: #{tpu_custom_call.1} parent=0
    #allocation3 [shape = 'u8[32768]{0}', space=vmem, size = 0x8000, scoped, tag = 'input window, operand 1']
    #allocation4 [shape = 's32[2]{0}', space=sflag, size = 0x8, scoped, tag = 'scoped memory for tpu_custom_call.1']
    #allocation5 [shape = 's32[2]{0}', space=sflag, size = 0x8, scoped, tag = 'scoped memory for tpu_custom_call.1']
    #allocation6 [shape = 'u8[32768]{0}', space=vmem, size = 0x8000, scoped, tag = 'output window, operand 0']
    %13 = vsyncpa [#allocation4], 0
    %s14 = scalar_lea.sflag [#allocation4], 1
    %15 = vsyncpa %s14, 0
    %16 = vsyncpa [#allocation5], 0
    %s17 = scalar_lea.sflag [#allocation5], 1
    %18 = vsyncpa %s17, 0
    loop: start=0, step=1, limit=6
    $region2: #{tpu_custom_call.1} parent=1 // loop_pre_header
      _
    $region3: #{tpu_custom_call.1} parent=1 // loop_header
      %s20 = sphi 0, %s24
      %p21 = scmp.ge.s32.totalorder %s20, 6
      %s27 = sphi 0, %s39
      %s28 = sphi 0, %s35
      %s29 = sphi 0, %s27
      %s30 = sphi 0, %s28
      %s31 = sphi 0, %s29
      %s32 = sphi 0, %s30
      %s42 = sphi 0, %s44
      %s45 = sphi 0, %s42
      %s46 = sphi 0, %s45
      %s62 = sphi 0, %s46
      %s70 = sphi 0, %s72
      %s73 = sphi 0, %s70
      %s74 = sphi 0, %s73
      %s90 = sphi 0, %s74
      %s94 = sphi 0, %s94
      %s96 = sphi 0, %s94
      %s97 = sphi 0, %s96
      %s111 = sphi 0, %s97
      %s115 = sphi 0, %s115
      %s117 = sphi 0, %s115
      %s118 = sphi 0, %s117
      %s132 = sphi 0, %s118
      %s136 = sphi 0, %s136
      %s138 = sphi 0, %s136
      %s139 = sphi 0, %s138
      %s153 = sphi 0, %s139
      %s157 = sphi 0, %s157
      %s159 = sphi 0, %s157
      %s160 = sphi 0, %s159
      %s174 = sphi 0, %s160
      %s178 = sphi 0, %s178
      %s180 = sphi 0, %s178
      %s181 = sphi 0, %s180
      %s195 = sphi 0, %s181
      %s203 = sphi 0, %s205
      %s206 = sphi 0, %s203
      %s207 = sphi 0, %s206
      %s223 = sphi 0, %s207
    $region4: #{tpu_custom_call.1} parent=1 // loop_header_branch
      %23 = sbr.rel (%p21) target = $region8
    $region5: #{tpu_custom_call.1} parent=1 // loop_body
      %s25 = ssub.s32 %s20, 1
      %s26 = ssub.s32 %s20, 2
      %s33 = sadd.s32 1, %s28
      %p34 = scmp.ge.s32.totalorder %s33, 2
      %s35 = scalar_select %p34, 0, %s33
      %s36 = sadd.s32 1, %s27
      %s37 = scalar_select %p34, %s36, %s27
      %p38 = scmp.ge.s32.totalorder %s37, 2
      %s39 = scalar_select %p38, 0, %s37
      %s40 = ssub.s32 %s27, %s39
      %p41 = scmp.eq.s32.totalorder %s40, 0
      %s43 = sadd.s32 %s42, 1
      %s44 = scalar_select %p41, %s42, %s43
      %p47 = pneg %p41
      %p48 = scmp.eq.s32.totalorder %s20, 3
      %p49 = por %p47, %p48
      %p50 = scmp.ne.s32.totalorder %s42, %s45
      %p51 = scmp.eq.s32.totalorder %s20, 0
      %p52 = por %p50, %p51
      %p53 = scmp.ne.s32.totalorder %s42, %s45
      %p54 = scmp.eq.s32.totalorder %s25, 3
      %p55 = por %p53, %p54
      %p56 = scmp.ne.s32.totalorder %s45, %s46
      %p57 = scmp.eq.s32.totalorder %s25, 0
      %p58 = por %p56, %p57
      %p59 = scmp.ne.s32.totalorder %s45, %s46
      %p60 = scmp.eq.s32.totalorder %s26, 3
      %p61 = por %p59, %p60
      %p63 = scmp.ne.s32.totalorder %s46, %s62
      %p64 = scmp.eq.s32.totalorder %s26, 0
      %p65 = por %p63, %p64
      %s66 = ssub.s32 %s27, %s39
      %s67 = ssub.s32 %s28, %s35
      %s68 = sor.u32 %s66, %s67
      %p69 = scmp.eq.s32.totalorder %s68, 0
      %s71 = sadd.s32 %s70, 1
      %s72 = scalar_select %p69, %s70, %s71
      %p75 = pneg %p69
      %p76 = scmp.eq.s32.totalorder %s20, 3
      %p77 = por %p75, %p76
      %p78 = scmp.ne.s32.totalorder %s70, %s73
      %p79 = scmp.eq.s32.totalorder %s20, 0
      %p80 = por %p78, %p79
      %p81 = scmp.ne.s32.totalorder %s70, %s73
      %p82 = scmp.eq.s32.totalorder %s25, 3
      %p83 = por %p81, %p82
      %p84 = scmp.ne.s32.totalorder %s73, %s74
      %p85 = scmp.eq.s32.totalorder %s25, 0
      %p86 = por %p84, %p85
      %p87 = scmp.ne.s32.totalorder %s73, %s74
      %p88 = scmp.eq.s32.totalorder %s26, 3
      %p89 = por %p87, %p88
      %p91 = scmp.ne.s32.totalorder %s74, %s90
      %p92 = scmp.eq.s32.totalorder %s26, 0
      %p93 = por %p91, %p92
      %s95 = sadd.s32 %s94, 1
      %p98 = scmp.eq.s32.totalorder %s20, 3
      %p99 = scmp.ne.s32.totalorder %s94, %s96
      %p100 = scmp.eq.s32.totalorder %s20, 0
      %p101 = por %p99, %p100
      %p102 = scmp.ne.s32.totalorder %s94, %s96
      %p103 = scmp.eq.s32.totalorder %s25, 3
      %p104 = por %p102, %p103
      %p105 = scmp.ne.s32.totalorder %s96, %s97
      %p106 = scmp.eq.s32.totalorder %s25, 0
      %p107 = por %p105, %p106
      %p108 = scmp.ne.s32.totalorder %s96, %s97
      %p109 = scmp.eq.s32.totalorder %s26, 3
      %p110 = por %p108, %p109
      %p112 = scmp.ne.s32.totalorder %s97, %s111
      %p113 = scmp.eq.s32.totalorder %s26, 0
      %p114 = por %p112, %p113
      %s116 = sadd.s32 %s115, 1
      %p119 = scmp.eq.s32.totalorder %s20, 3
      %p120 = scmp.ne.s32.totalorder %s115, %s117
      %p121 = scmp.eq.s32.totalorder %s20, 0
      %p122 = por %p120, %p121
      %p123 = scmp.ne.s32.totalorder %s115, %s117
      %p124 = scmp.eq.s32.totalorder %s25, 3
      %p125 = por %p123, %p124
      %p126 = scmp.ne.s32.totalorder %s117, %s118
      %p127 = scmp.eq.s32.totalorder %s25, 0
      %p128 = por %p126, %p127
      %p129 = scmp.ne.s32.totalorder %s117, %s118
      %p130 = scmp.eq.s32.totalorder %s26, 3
      %p131 = por %p129, %p130
      %p133 = scmp.ne.s32.totalorder %s118, %s132
      %p134 = scmp.eq.s32.totalorder %s26, 0
      %p135 = por %p133, %p134
      %s137 = sadd.s32 %s136, 1
      %p140 = scmp.eq.s32.totalorder %s20, 3
      %p141 = scmp.ne.s32.totalorder %s136, %s138
      %p142 = scmp.eq.s32.totalorder %s20, 0
      %p143 = por %p141, %p142
      %p144 = scmp.ne.s32.totalorder %s136, %s138
      %p145 = scmp.eq.s32.totalorder %s25, 3
      %p146 = por %p144, %p145
      %p147 = scmp.ne.s32.totalorder %s138, %s139
      %p148 = scmp.eq.s32.totalorder %s25, 0
      %p149 = por %p147, %p148
      %p150 = scmp.ne.s32.totalorder %s138, %s139
      %p151 = scmp.eq.s32.totalorder %s26, 3
      %p152 = por %p150, %p151
      %p154 = scmp.ne.s32.totalorder %s139, %s153
      %p155 = scmp.eq.s32.totalorder %s26, 0
      %p156 = por %p154, %p155
      %s158 = sadd.s32 %s157, 1
      %p161 = scmp.eq.s32.totalorder %s20, 3
      %p162 = scmp.ne.s32.totalorder %s157, %s159
      %p163 = scmp.eq.s32.totalorder %s20, 0
      %p164 = por %p162, %p163
      %p165 = scmp.ne.s32.totalorder %s157, %s159
      %p166 = scmp.eq.s32.totalorder %s25, 3
      %p167 = por %p165, %p166
      %p168 = scmp.ne.s32.totalorder %s159, %s160
      %p169 = scmp.eq.s32.totalorder %s25, 0
      %p170 = por %p168, %p169
      %p171 = scmp.ne.s32.totalorder %s159, %s160
      %p172 = scmp.eq.s32.totalorder %s26, 3
      %p173 = por %p171, %p172
      %p175 = scmp.ne.s32.totalorder %s160, %s174
      %p176 = scmp.eq.s32.totalorder %s26, 0
      %p177 = por %p175, %p176
      %s179 = sadd.s32 %s178, 1
      %p182 = scmp.eq.s32.totalorder %s20, 3
      %p183 = scmp.ne.s32.totalorder %s178, %s180
      %p184 = scmp.eq.s32.totalorder %s20, 0
      %p185 = por %p183, %p184
      %p186 = scmp.ne.s32.totalorder %s178, %s180
      %p187 = scmp.eq.s32.totalorder %s25, 3
      %p188 = por %p186, %p187
      %p189 = scmp.ne.s32.totalorder %s180, %s181
      %p190 = scmp.eq.s32.totalorder %s25, 0
      %p191 = por %p189, %p190
      %p192 = scmp.ne.s32.totalorder %s180, %s181
      %p193 = scmp.eq.s32.totalorder %s26, 3
      %p194 = por %p192, %p193
      %p196 = scmp.ne.s32.totalorder %s181, %s195
      %p197 = scmp.eq.s32.totalorder %s26, 0
      %p198 = por %p196, %p197
      %s199 = ssub.s32 %s27, %s39
      %s200 = ssub.s32 %s28, %s35
      %s201 = sor.u32 %s199, %s200
      %p202 = scmp.eq.s32.totalorder %s201, 0
      %s204 = sadd.s32 %s203, 1
      %s205 = scalar_select %p202, %s203, %s204
      %p208 = pneg %p202
      %p209 = scmp.eq.s32.totalorder %s20, 3
      %p210 = por %p208, %p209
      %p211 = scmp.ne.s32.totalorder %s203, %s206
      %p212 = scmp.eq.s32.totalorder %s20, 0
      %p213 = por %p211, %p212
      %p214 = scmp.ne.s32.totalorder %s203, %s206
      %p215 = scmp.eq.s32.totalorder %s25, 3
      %p216 = por %p214, %p215
      %p217 = scmp.ne.s32.totalorder %s206, %s207
      %p218 = scmp.eq.s32.totalorder %s25, 0
      %p219 = por %p217, %p218
      %p220 = scmp.ne.s32.totalorder %s206, %s207
      %p221 = scmp.eq.s32.totalorder %s26, 3
      %p222 = por %p220, %p221
      %p224 = scmp.ne.s32.totalorder %s207, %s223
      %p225 = scmp.eq.s32.totalorder %s26, 0
      %p226 = por %p224, %p225
      %p227 = scmp.le.s32.totalorder 1, %s20
      %p228 = scmp.lt.s32.totalorder %s20, 5
      %p229 = pnand %p227, %p228
      %p230 = pneg %p229
      // Predicated region
      $region9: #{tpu_custom_call.1} parent=5 // pred_check
        _
      $region10: #{tpu_custom_call.1} parent=5 // pred_check_branch
        %232 = sbr.rel (%p229) target = $region12
      $region11: #{tpu_custom_call.1} parent=5 // pred_region
        %s233 = ssub.s32 %s20, 1
        // Predicated region
        $region13: #{tpu_custom_call.1} parent=11 // pred_check
          %p234 = pneg %p107
        $region14: #{tpu_custom_call.1} parent=11 // pred_check_branch
          %236 = sbr.rel (%p234) target = $region16
        $region15: #{tpu_custom_call.1} parent=11 // pred_region
          _
        $region16: #{tpu_custom_call.1} parent=11 // pred_fallthru
          _
        // Predicated region
        $region17: #{tpu_custom_call.1} parent=11 // pred_check
          %p237 = pneg %p128
        $region18: #{tpu_custom_call.1} parent=11 // pred_check_branch
          %239 = sbr.rel (%p237) target = $region20
        $region19: #{tpu_custom_call.1} parent=11 // pred_region
          _
        $region20: #{tpu_custom_call.1} parent=11 // pred_fallthru
          _
        // Predicated region
        $region21: #{tpu_custom_call.1} parent=11 // pred_check
          %p240 = pneg %p149
        $region22: #{tpu_custom_call.1} parent=11 // pred_check_branch
          %242 = sbr.rel (%p240) target = $region24
        $region23: #{tpu_custom_call.1} parent=11 // pred_region
          _
        $region24: #{tpu_custom_call.1} parent=11 // pred_fallthru
          _
        // Predicated region
        $region25: #{tpu_custom_call.1} parent=11 // pred_check
          %p243 = pneg %p170
        $region26: #{tpu_custom_call.1} parent=11 // pred_check_branch
          %245 = sbr.rel (%p243) target = $region28
        $region27: #{tpu_custom_call.1} parent=11 // pred_region
          _
        $region28: #{tpu_custom_call.1} parent=11 // pred_fallthru
          _
        // Predicated region
        $region29: #{tpu_custom_call.1} parent=11 // pred_check
          %p246 = pneg %p191
        $region30: #{tpu_custom_call.1} parent=11 // pred_check_branch
          %248 = sbr.rel (%p246) target = $region32
        $region31: #{tpu_custom_call.1} parent=11 // pred_region
          _
        $region32: #{tpu_custom_call.1} parent=11 // pred_fallthru
          _
      $region12: #{tpu_custom_call.1} parent=5 // pred_fallthru
        _
      %p249 = scmp.lt.s32.totalorder %s20, 4
      // Predicated region
      $region33: #{tpu_custom_call.1} parent=5 // pred_check
        %p250 = pneg %p249
      $region34: #{tpu_custom_call.1} parent=5 // pred_check_branch
        %252 = sbr.rel (%p250) target = $region36
      $region35: #{tpu_custom_call.1} parent=5 // pred_region
        // Predicated region
        $region37: #{tpu_custom_call.1} parent=35 // pred_check
          %p253 = pneg %p52
        $region38: #{tpu_custom_call.1} parent=35 // pred_check_branch
          %255 = sbr.rel (%p253) target = $region40
        $region39: #{tpu_custom_call.1} parent=35 // pred_region
          %p256 = scmp.lt.s32.totalorder %s27, 1
          %s257 = scalar_select %p256, %s27, 1
          %s258 = smul.addr %s257, 8
          %s259 = smul.addr %s258, 8
          %s260 = scalar_lea.vmem %s0, %s259
        $region40: #{tpu_custom_call.1} parent=35 // pred_fallthru
          _
        // Predicated region
        $region41: #{tpu_custom_call.1} parent=35 // pred_check
          %p261 = pneg %p80
        $region42: #{tpu_custom_call.1} parent=35 // pred_check_branch
          %263 = sbr.rel (%p261) target = $region44
        $region43: #{tpu_custom_call.1} parent=35 // pred_region
          %s264 = sand.u32 %s70, 1
          %s265 = scalar_lea.sflag [#allocation4], %s264
          %s266 = sand.u32 %s70, 1
          %s267 = smul.addr %s266, 32
          %s268 = scalar_lea.vmem [#allocation3], %s267
          %s270 = ssub.s32 512, 512
          %271 = vsyncadd %s265, %s270
          %s272 = smul.addr %s27, 8
          %s273 = sadd.s32 %s28, %s272
          %s274 = smul.addr %s273, 128
          %s275 = scalar_lea.hbm %s1, %s274
          %s276 = sshll.u32 %s268, 4
          %s277 = int_to_ptr.vmem [resolvable:$true] %s276
          %282 = dma.hbm_to_vmem [thread:$0]  %s275, 512, %s277, %s265, 256, 128, 8
        $region44: #{tpu_custom_call.1} parent=35 // pred_fallthru
          _
      $region36: #{tpu_custom_call.1} parent=5 // pred_fallthru
        _
      %p283 = scmp.le.s32.totalorder 1, %s20
      %p284 = scmp.lt.s32.totalorder %s20, 5
      %p285 = pnand %p283, %p284
      %p286 = pneg %p285
      // Predicated region
      $region45: #{tpu_custom_call.1} parent=5 // pred_check
        _
      $region46: #{tpu_custom_call.1} parent=5 // pred_check_branch
        %288 = sbr.rel (%p285) target = $region48
      $region47: #{tpu_custom_call.1} parent=5 // pred_region
        %s289 = ssub.s32 %s20, 1
        %s290 = sand.u32 %s73, 1
        %s291 = scalar_lea.sflag [#allocation4], %s290
        %s292 = sand.u32 %s73, 1
        %s293 = smul.addr %s292, 32
        %s294 = scalar_lea.vmem [#allocation3], %s293
        // Predicated region
        $region49: #{tpu_custom_call.1} parent=47 // pred_check
          %p295 = pneg %p86
        $region50: #{tpu_custom_call.1} parent=47 // pred_check_branch
          %297 = sbr.rel (%p295) target = $region52
        $region51: #{tpu_custom_call.1} parent=47 // pred_region
          %298 = dma.done %s291, 512
        $region52: #{tpu_custom_call.1} parent=47 // pred_fallthru
          _
        %p299 = scmp.lt.s32.totalorder %s29, 1
        %s300 = scalar_select %p299, %s29, 1
        %s301 = smul.addr %s300, 8
        %s302 = smul.addr %s301, 8
        %s303 = scalar_lea.vmem %s0, %s302
        %p304 = pneg %p58
        %p305 = pneg %p55
        %s306 = sand.u32 %s73, 1
        %s307 = scalar_lea.sflag [#allocation4], %s306
        %s308 = sand.u32 %s73, 1
        %s309 = smul.addr %s308, 32
        %s310 = scalar_lea.vmem [#allocation3], %s309
        %p311 = pneg %p86
        %p312 = pneg %p83
        %p313 = pneg %p107
        %p314 = pneg %p104
        %p315 = pneg %p128
        %p316 = pneg %p125
        %p317 = pneg %p149
        %p318 = pneg %p146
        %p319 = pneg %p170
        %p320 = pneg %p167
        %p321 = pneg %p191
        %p322 = pneg %p188
        %p323 = pneg %p219
        %p324 = pneg %p216
        %s325 = sand.u32 %s206, 1
        %s326 = scalar_lea.sflag [#allocation5], %s325
        %s327 = sand.u32 %s206, 1
        %s328 = smul.addr %s327, 32
        %s329 = scalar_lea.vmem [#allocation6], %s328
        %p330 = scmp.lt.s32.totalorder %s29, 1
        %s331 = scalar_select %p330, %s29, 1
        %s332 = smul.addr %s331, 8
        %s333 = smul.addr %s332, 8
        %s334 = scalar_lea.vmem %s0, %s333
        %v336 = vld [vmem:[%s334] sm:$0xff]
        %v337 = vld [vmem:[%s334 + $0x8] sm:$0xff]
        %v338 = vld [vmem:[%s334 + $0x10] sm:$0xff]
        %v339 = vld [vmem:[%s334 + $0x18] sm:$0xff]
        %v340 = vld [vmem:[%s334 + $0x20] sm:$0xff]
        %v341 = vld [vmem:[%s334 + $0x28] sm:$0xff]
        %v342 = vld [vmem:[%s334 + $0x30] sm:$0xff]
        %v343 = vld [vmem:[%s334 + $0x38] sm:$0xff]
        %v344 = vld [vmem:[%s294] sm:$0xff]
        %v345 = vld [vmem:[%s294 + $0x8] sm:$0xff]
        %v346 = vld [vmem:[%s294 + $0x10] sm:$0xff]
        %v347 = vld [vmem:[%s294 + $0x18] sm:$0xff]
        %v348 = vpack.c.bf16 %v338, %v336
        %v349 = vpack.c.bf16 %v339, %v337
        %v350 = vpack.c.bf16 %v342, %v340
        %v351 = vpack.c.bf16 %v343, %v341
        %v352 = vld [vmem:[%s2] sm:$0xff]
        %v353 = vld [vmem:[%s2 + $0x8] sm:$0xff]
        %v354 = vld [vmem:[%s2 + $0x10] sm:$0xff]
        %v355 = vld [vmem:[%s2 + $0x18] sm:$0xff]
        %v356 = vld [vmem:[%s2 + $0x20] sm:$0xf]
        %v357 = vpack.c.bf16 %v353, %v352
        %v358 = vpack.c.bf16 %v355, %v354
        %v359 = vpack.c.bf16 %v356, %v356
        %v360 = vld [vmem:[%s3] sm:$0xff]
        %v361 = vld [vmem:[%s3 + $0x8] sm:$0xff]
        %v362 = vld [vmem:[%s3 + $0x10] sm:$0xff]
        %v363 = vld [vmem:[%s3 + $0x18] sm:$0xff]
        %v364 = vld [vmem:[%s3 + $0x20] sm:$0xf]
        %366 = vset.pattern.permute.xlu0 0
        %367 = vperm.xlu0 %366, %v360
        %v368 = vpop.permute.xlu0 %367
        %371 = vset.pattern.permute.xlu0 0
        %372 = vperm.xlu0 %371, %v361
        %v373 = vpop.permute.xlu0 %372
        %376 = vset.pattern.permute.xlu0 0
        %377 = vperm.xlu0 %376, %v362
        %v378 = vpop.permute.xlu0 %377
        %381 = vset.pattern.permute.xlu0 0
        %382 = vperm.xlu0 %381, %v363
        %v383 = vpop.permute.xlu0 %382
        %386 = vset.pattern.permute.xlu0 0
        %387 = vperm.xlu0 %386, %v364
        %v388 = vpop.permute.xlu0 %387
        %vm390 = vcmask 261120
        %v392 = vsel %vm390, %v357, 0
        %v395 = vsel %vm390, %v358, 0
        %v398 = vsel %vm390, %v359, 0
        %400 = vmatprep.subr.bf16.mxu0 %v349
        %401 = vmatpush1.bf16.msra.mxu0 %v348
        %402 = vmatprep.subr.bf16.mxu0 %v351
        %403 = vmatpush1.bf16.msra.mxu0 %v350
        %404 = vmatprep.subr.bf16.mxu0 0
        %405 = vmatpush1.bf16.msra.mxu0 0
        %406 = vmatprep.subr.bf16.mxu0 0
        %407 = vmatpush1.bf16.msra.mxu0 0
        %408 = vmatprep.subr.bf16.mxu0 0
        %409 = vmatpush1.bf16.msra.mxu0 0
        %410 = vmatprep.subr.bf16.mxu0 0
        %411 = vmatpush1.bf16.msra.mxu0 0
        %412 = vmatprep.subr.bf16.mxu0 0
        %413 = vmatpush1.bf16.msra.mxu0 0
        %414 = vmatprep.subr.bf16.mxu0 0
        %415 = vmatpush1.bf16.msra.mxu0 0
        %416 = vmatprep.subr.bf16.mxu0 0
        %417 = vmatpush1.bf16.msra.mxu0 0
        %418 = vmatprep.subr.bf16.mxu0 0
        %419 = vmatpush1.bf16.msra.mxu0 0
        %420 = vmatprep.subr.bf16.mxu0 0
        %421 = vmatpush1.bf16.msra.mxu0 0
        %422 = vmatprep.subr.bf16.mxu0 0
        %423 = vmatpush1.bf16.msra.mxu0 0
        %424 = vmatprep.subr.bf16.mxu0 0
        %425 = vmatpush1.bf16.msra.mxu0 0
        %426 = vmatprep.subr.bf16.mxu0 0
        %427 = vmatpush1.bf16.msra.mxu0 0
        %428 = vmatprep.subr.bf16.mxu0 0
        %429 = vmatpush1.bf16.msra.mxu0 0
        %430 = vmatprep.subr.bf16.mxu0 0
        %431 = vmatpush1.bf16.msra.mxu0 0
        %432 = vmatprep.mubr.bf16.mxu0 0
        %433 = vmatmul.mubr.bf16.gmra.mrb[0].mxu0 %v392
        %v434 = vpop.f32.mrb[0].mxu0
        %v435 = vadd.f32 %v368, %v434
        %v436 = vpop.f32.mrb[0].mxu0
        %v437 = vadd.f32 %v368, %v436
        %v438 = vpop.f32.mrb[0].mxu0
        %v439 = vadd.f32 %v373, %v438
        %v440 = vpop.f32.mrb[0].mxu0
        %v441 = vadd.f32 %v373, %v440
        %442 = vmatprep.mubr.bf16.mxu0 0
        %443 = vmatmul.mubr.bf16.gmra.mrb[0].mxu0 %v395
        %v444 = vpop.f32.mrb[0].mxu0
        %v445 = vadd.f32 %v378, %v444
        %v446 = vpop.f32.mrb[0].mxu0
        %v447 = vadd.f32 %v378, %v446
        %v448 = vpop.f32.mrb[0].mxu0
        %v449 = vadd.f32 %v383, %v448
        %v450 = vpop.f32.mrb[0].mxu0
        %v451 = vadd.f32 %v383, %v450
        %452 = vmatprep.mubr.bf16.mxu0 0
        %453 = vmatmul.mubr.bf16.gmra.mrb[0].mxu0 %v398
        %v454 = vpop.f32.mrb[0].mxu0
        %v455 = vadd.f32 %v388, %v454
        %v456 = vpop.f32.mrb[0].mxu0
        %v457 = vadd.f32 %v388, %v456
        %v458 = vpop.f32.mrb[0].mxu0
        %v459 = vpop.f32.mrb[0].mxu0
        %460 = vdwg.mxu0
        %461 = vxpose.xlu0.b32.start [1/16] %v344, 128
        %462 = vxpose.xlu0.b32.cont [2/16] %v345, 128
        %463 = vxpose.xlu0.b32.cont [3/16] %v346, 128
        %464 = vxpose.xlu0.b32.cont [4/16] %v347, 128
        %465 = vxpose.xlu0.b32.cont [5/16] 0.0, 128
        %466 = vxpose.xlu0.b32.cont [6/16] 0.0, 128
        %467 = vxpose.xlu0.b32.cont [7/16] 0.0, 128
        %468 = vxpose.xlu0.b32.cont [8/16] 0.0, 128
        %469 = vxpose.xlu0.b32.cont [9/16] 0.0, 128
        %470 = vxpose.xlu0.b32.cont [10/16] 0.0, 128
        %471 = vxpose.xlu0.b32.cont [11/16] 0.0, 128
        %472 = vxpose.xlu0.b32.cont [12/16] 0.0, 128
        %473 = vxpose.xlu0.b32.cont [13/16] 0.0, 128
        %474 = vxpose.xlu0.b32.cont [14/16] 0.0, 128
        %475 = vxpose.xlu0.b32.cont [15/16] 0.0, 128
        %476 = vxpose.xlu0.b32.end [16/16] 0.0, 128
        %v477 = vpop.trf.xlu0
        %v478 = vpop.trf.xlu0
        %v479 = vpop.trf.xlu0
        %v480 = vpop.trf.xlu0
        %v481 = vpop.trf.xlu0
        %v482 = vpop.trf.xlu0
        %v483 = vpop.trf.xlu0
        %v484 = vpop.trf.xlu0
        %v485 = vpop.trf.xlu0
        %v486 = vpop.trf.xlu0
        %v487 = vpop.trf.xlu0
        %v488 = vpop.trf.xlu0
        %v489 = vpop.trf.xlu0
        %v490 = vpop.trf.xlu0
        %v491 = vpop.trf.xlu0
        %v492 = vpop.trf.xlu0
        %v493 = vpack.c.bf16 %v478, %v477
        %v494 = vpack.c.bf16 %v480, %v479
        %v495 = vpack.c.bf16 %v482, %v481
        %v496 = vpack.c.bf16 %v484, %v483
        %v497 = vpack.c.bf16 %v486, %v485
        %v498 = vpack.c.bf16 %v488, %v487
        %v499 = vpack.c.bf16 %v490, %v489
        %v500 = vpack.c.bf16 %v492, %v491
        %v501 = vld [vmem:[%s4] sm:$0xff]
        %v502 = vld [vmem:[%s4 + $0x8] sm:$0xff]
        %v503 = vld [vmem:[%s4 + $0x10] sm:$0xff]
        %v504 = vld [vmem:[%s4 + $0x18] sm:$0xff]
        %v505 = vpack.c.bf16 %v502, %v501
        %v506 = vpack.c.bf16 %v504, %v503
        %v507 = vld [vmem:[%s5] sm:$0x1]
        %v509 = vlaneseq
        %v510 = vshrl.u32 %v509, 7
        %v511 = vsub.s32 0, %v510
        %v512 = vrot.slane %v507, %v511
        %v515 = vsel %vm390, %v493, 0
        %v518 = vsel %vm390, %v494, 0
        %v521 = vsel %vm390, %v495, 0
        %v524 = vsel %vm390, %v496, 0
        %v527 = vsel %vm390, %v497, 0
        %v530 = vsel %vm390, %v498, 0
        %v533 = vsel %vm390, %v499, 0
        %v536 = vsel %vm390, %v500, 0
        %538 = vmatprep.subr.bf16.mxu0 0
        %539 = vmatpush1.bf16.msra.mxu0 %v505
        %540 = vmatprep.subr.bf16.mxu0 0
        %541 = vmatpush1.bf16.msra.mxu0 %v506
        %542 = vmatprep.subr.bf16.mxu0 0
        %543 = vmatpush1.bf16.msra.mxu0 0
        %544 = vmatprep.subr.bf16.mxu0 0
        %545 = vmatpush1.bf16.msra.mxu0 0
        %546 = vmatprep.subr.bf16.mxu0 0
        %547 = vmatpush1.bf16.msra.mxu0 0
        %548 = vmatprep.subr.bf16.mxu0 0
        %549 = vmatpush1.bf16.msra.mxu0 0
        %550 = vmatprep.subr.bf16.mxu0 0
        %551 = vmatpush1.bf16.msra.mxu0 0
        %552 = vmatprep.subr.bf16.mxu0 0
        %553 = vmatpush1.bf16.msra.mxu0 0
        %554 = vmatprep.subr.bf16.mxu0 0
        %555 = vmatpush1.bf16.msra.mxu0 0
        %556 = vmatprep.subr.bf16.mxu0 0
        %557 = vmatpush1.bf16.msra.mxu0 0
        %558 = vmatprep.subr.bf16.mxu0 0
        %559 = vmatpush1.bf16.msra.mxu0 0
        %560 = vmatprep.subr.bf16.mxu0 0
        %561 = vmatpush1.bf16.msra.mxu0 0
        %562 = vmatprep.subr.bf16.mxu0 0
        %563 = vmatpush1.bf16.msra.mxu0 0
        %564 = vmatprep.subr.bf16.mxu0 0
        %565 = vmatpush1.bf16.msra.mxu0 0
        %566 = vmatprep.subr.bf16.mxu0 0
        %567 = vmatpush1.bf16.msra.mxu0 0
        %568 = vmatprep.subr.bf16.mxu0 0
        %569 = vmatpush1.bf16.msra.mxu0 0
        %570 = vmatprep.mubr.bf16.mxu0 0
        %571 = vmatmul.mubr.bf16.gmra.mrb[0].mxu0 %v515
        %v572 = vpop.f32.mrb[0].mxu0
        %v573 = vadd.f32 %v512, %v572
        %v574 = vpop.f32.mrb[0].mxu0
        %v575 = vpop.f32.mrb[0].mxu0
        %v576 = vadd.f32 %v512, %v575
        %v577 = vpop.f32.mrb[0].mxu0
        %578 = vmatprep.mubr.bf16.mxu0 0
        %579 = vmatmul.mubr.bf16.gmra.mrb[0].mxu0 %v518
        %v580 = vpop.f32.mrb[0].mxu0
        %v581 = vadd.f32 %v512, %v580
        %v582 = vpop.f32.mrb[0].mxu0
        %v583 = vpop.f32.mrb[0].mxu0
        %v584 = vadd.f32 %v512, %v583
        %v585 = vpop.f32.mrb[0].mxu0
        %586 = vmatprep.mubr.bf16.mxu0 0
        %587 = vmatmul.mubr.bf16.gmra.mrb[0].mxu0 %v521
        %v588 = vpop.f32.mrb[0].mxu0
        %v589 = vadd.f32 %v512, %v588
        %v590 = vpop.f32.mrb[0].mxu0
        %v591 = vpop.f32.mrb[0].mxu0
        %v592 = vadd.f32 %v512, %v591
        %v593 = vpop.f32.mrb[0].mxu0
        %594 = vmatprep.mubr.bf16.mxu0 0
        %595 = vmatmul.mubr.bf16.gmra.mrb[0].mxu0 %v524
        %v596 = vpop.f32.mrb[0].mxu0
        %v597 = vadd.f32 %v512, %v596
        %v598 = vpop.f32.mrb[0].mxu0
        %v599 = vpop.f32.mrb[0].mxu0
        %v600 = vadd.f32 %v512, %v599
        %v601 = vpop.f32.mrb[0].mxu0
        %602 = vmatprep.mubr.bf16.mxu0 0
        %603 = vmatmul.mubr.bf16.gmra.mrb[0].mxu0 %v527
        %v604 = vpop.f32.mrb[0].mxu0
        %v605 = vadd.f32 %v512, %v604
        %v606 = vpop.f32.mrb[0].mxu0
        %v607 = vpop.f32.mrb[0].mxu0
        %v608 = vadd.f32 %v512, %v607
        %v609 = vpop.f32.mrb[0].mxu0
        %610 = vmatprep.mubr.bf16.mxu0 0
        %611 = vmatmul.mubr.bf16.gmra.mrb[0].mxu0 %v530
        %v612 = vpop.f32.mrb[0].mxu0
        %v613 = vadd.f32 %v512, %v612
        %v614 = vpop.f32.mrb[0].mxu0
        %v615 = vpop.f32.mrb[0].mxu0
        %v616 = vadd.f32 %v512, %v615
        %v617 = vpop.f32.mrb[0].mxu0
        %618 = vmatprep.mubr.bf16.mxu0 0
        %619 = vmatmul.mubr.bf16.gmra.mrb[0].mxu0 %v533
        %v620 = vpop.f32.mrb[0].mxu0
        %v621 = vadd.f32 %v512, %v620
        %v622 = vpop.f32.mrb[0].mxu0
        %v623 = vpop.f32.mrb[0].mxu0
        %v624 = vadd.f32 %v512, %v623
        %v625 = vpop.f32.mrb[0].mxu0
        %626 = vmatprep.mubr.bf16.mxu0 0
        %627 = vmatmul.mubr.bf16.gmra.mrb[0].mxu0 %v536
        %v628 = vpop.f32.mrb[0].mxu0
        %v629 = vadd.f32 %v512, %v628
        %v630 = vpop.f32.mrb[0].mxu0
        %v631 = vpop.f32.mrb[0].mxu0
        %v632 = vadd.f32 %v512, %v631
        %v633 = vpop.f32.mrb[0].mxu0
        %634 = vdwg.mxu0
        %v635 = vpack.c.bf16 %v576, %v573
        %v636 = vpack.c.bf16 %v584, %v581
        %v637 = vpack.c.bf16 %v592, %v589
        %v638 = vpack.c.bf16 %v600, %v597
        %v639 = vpack.c.bf16 %v608, %v605
        %v640 = vpack.c.bf16 %v616, %v613
        %v641 = vpack.c.bf16 %v624, %v621
        %v642 = vpack.c.bf16 %v632, %v629
        %v643 = vpack.c.bf16 %v455, %v455
        %v644 = vpack.c.bf16 %v457, %v457
        %vm645 = vcmask 31744
        %v647 = vsel %vm645, %v635, 0
        %v650 = vsel %vm645, %v636, 0
        %v653 = vsel %vm645, %v637, 0
        %v656 = vsel %vm645, %v638, 0
        %v659 = vsel %vm645, %v639, 0
        %v662 = vsel %vm645, %v640, 0
        %v665 = vsel %vm645, %v641, 0
        %v668 = vsel %vm645, %v642, 0
        %vm670 = vcmask 1041408
        %v672 = vsel %vm670, %v643, 0
        %v675 = vsel %vm670, %v644, 0
        %677 = vmatprep.subr.bf16.mxu0 %v675
        %678 = vmatpush1.bf16.msra.mxu0 %v672
        %679 = vmatprep.subr.bf16.mxu0 0
        %680 = vmatpush1.bf16.msra.mxu0 0
        %681 = vmatprep.subr.bf16.mxu0 0
        %682 = vmatpush1.bf16.msra.mxu0 0
        %683 = vmatprep.subr.bf16.mxu0 0
        %684 = vmatpush1.bf16.msra.mxu0 0
        %685 = vmatprep.subr.bf16.mxu0 0
        %686 = vmatpush1.bf16.msra.mxu0 0
        %687 = vmatprep.subr.bf16.mxu0 0
        %688 = vmatpush1.bf16.msra.mxu0 0
        %689 = vmatprep.subr.bf16.mxu0 0
        %690 = vmatpush1.bf16.msra.mxu0 0
        %691 = vmatprep.subr.bf16.mxu0 0
        %692 = vmatpush1.bf16.msra.mxu0 0
        %693 = vmatprep.subr.bf16.mxu0 0
        %694 = vmatpush1.bf16.msra.mxu0 0
        %695 = vmatprep.subr.bf16.mxu0 0
        %696 = vmatpush1.bf16.msra.mxu0 0
        %697 = vmatprep.subr.bf16.mxu0 0
        %698 = vmatpush1.bf16.msra.mxu0 0
        %699 = vmatprep.subr.bf16.mxu0 0
        %700 = vmatpush1.bf16.msra.mxu0 0
        %701 = vmatprep.subr.bf16.mxu0 0
        %702 = vmatpush1.bf16.msra.mxu0 0
        %703 = vmatprep.subr.bf16.mxu0 0
        %704 = vmatpush1.bf16.msra.mxu0 0
        %705 = vmatprep.subr.bf16.mxu0 0
        %706 = vmatpush1.bf16.msra.mxu0 0
        %707 = vmatprep.subr.bf16.mxu0 0
        %708 = vmatpush1.bf16.msra.mxu0 0
        %709 = vmatprep.mubr.bf16.mxu0 0
        %710 = vmatmul.mubr.bf16.gmra.mrb[0].mxu0 %v647
        %v711 = vpop.f32.mrb[0].mxu0
        %v712 = vadd.f32 0.0, %v711
        %v713 = vpop.f32.mrb[0].mxu0
        %v714 = vadd.f32 0.0, %v713
        %v715 = vpop.f32.mrb[0].mxu0
        %v716 = vadd.f32 0.0, %v715
        %v717 = vpop.f32.mrb[0].mxu0
        %v718 = vadd.f32 0.0, %v717
        %719 = vmatprep.mubr.bf16.mxu0 0
        %720 = vmatmul.mubr.bf16.gmra.mrb[0].mxu0 %v650
        %v721 = vpop.f32.mrb[0].mxu0
        %v722 = vadd.f32 0.0, %v721
        %v723 = vpop.f32.mrb[0].mxu0
        %v724 = vadd.f32 0.0, %v723
        %v725 = vpop.f32.mrb[0].mxu0
        %v726 = vadd.f32 0.0, %v725
        %v727 = vpop.f32.mrb[0].mxu0
        %v728 = vadd.f32 0.0, %v727
        %729 = vmatprep.mubr.bf16.mxu0 0
        %730 = vmatmul.mubr.bf16.gmra.mrb[0].mxu0 %v653
        %v731 = vpop.f32.mrb[0].mxu0
        %v732 = vadd.f32 0.0, %v731
        %v733 = vpop.f32.mrb[0].mxu0
        %v734 = vadd.f32 0.0, %v733
        %v735 = vpop.f32.mrb[0].mxu0
        %v736 = vadd.f32 0.0, %v735
        %v737 = vpop.f32.mrb[0].mxu0
        %v738 = vadd.f32 0.0, %v737
        %739 = vmatprep.mubr.bf16.mxu0 0
        %740 = vmatmul.mubr.bf16.gmra.mrb[0].mxu0 %v656
        %v741 = vpop.f32.mrb[0].mxu0
        %v742 = vadd.f32 0.0, %v741
        %v743 = vpop.f32.mrb[0].mxu0
        %v744 = vadd.f32 0.0, %v743
        %v745 = vpop.f32.mrb[0].mxu0
        %v746 = vadd.f32 0.0, %v745
        %v747 = vpop.f32.mrb[0].mxu0
        %v748 = vadd.f32 0.0, %v747
        %749 = vmatprep.mubr.bf16.mxu0 0
        %750 = vmatmul.mubr.bf16.gmra.mrb[0].mxu0 %v659
        %v751 = vpop.f32.mrb[0].mxu0
        %v752 = vadd.f32 0.0, %v751
        %v753 = vpop.f32.mrb[0].mxu0
        %v754 = vadd.f32 0.0, %v753
        %v755 = vpop.f32.mrb[0].mxu0
        %v756 = vadd.f32 0.0, %v755
        %v757 = vpop.f32.mrb[0].mxu0
        %v758 = vadd.f32 0.0, %v757
        %759 = vmatprep.mubr.bf16.mxu0 0
        %760 = vmatmul.mubr.bf16.gmra.mrb[0].mxu0 %v662
        %v761 = vpop.f32.mrb[0].mxu0
        %v762 = vadd.f32 0.0, %v761
        %v763 = vpop.f32.mrb[0].mxu0
        %v764 = vadd.f32 0.0, %v763
        %v765 = vpop.f32.mrb[0].mxu0
        %v766 = vadd.f32 0.0, %v765
        %v767 = vpop.f32.mrb[0].mxu0
        %v768 = vadd.f32 0.0, %v767
        %769 = vmatprep.mubr.bf16.mxu0 0
        %770 = vmatmul.mubr.bf16.gmra.mrb[0].mxu0 %v665
        %v771 = vpop.f32.mrb[0].mxu0
        %v772 = vadd.f32 0.0, %v771
        %v773 = vpop.f32.mrb[0].mxu0
        %v774 = vadd.f32 0.0, %v773
        %v775 = vpop.f32.mrb[0].mxu0
        %v776 = vadd.f32 0.0, %v775
        %v777 = vpop.f32.mrb[0].mxu0
        %v778 = vadd.f32 0.0, %v777
        %779 = vmatprep.mubr.bf16.mxu0 0
        %780 = vmatmul.mubr.bf16.gmra.mrb[0].mxu0 %v668
        %v781 = vpop.f32.mrb[0].mxu0
        %v782 = vadd.f32 0.0, %v781
        %v783 = vpop.f32.mrb[0].mxu0
        %v784 = vadd.f32 0.0, %v783
        %v785 = vpop.f32.mrb[0].mxu0
        %v786 = vadd.f32 0.0, %v785
        %v787 = vpop.f32.mrb[0].mxu0
        %v788 = vadd.f32 0.0, %v787
        %789 = vdwg.mxu0
        %v790 = vmax.f32 %v712, %v714
        %791 = vmax.xlane.f32.xlu0 %v790
        %v792 = vpop.xlane.xlu0 %791
        %v793 = vmax.f32 %v716, %v718
        %794 = vmax.xlane.f32.xlu0 %v793
        %v795 = vpop.xlane.xlu0 %794
        %v796 = vmax.f32 %v722, %v724
        %797 = vmax.xlane.f32.xlu0 %v796
        %v798 = vpop.xlane.xlu0 %797
        %v799 = vmax.f32 %v726, %v728
        %800 = vmax.xlane.f32.xlu0 %v799
        %v801 = vpop.xlane.xlu0 %800
        %v802 = vmax.f32 %v732, %v734
        %803 = vmax.xlane.f32.xlu0 %v802
        %v804 = vpop.xlane.xlu0 %803
        %v805 = vmax.f32 %v736, %v738
        %806 = vmax.xlane.f32.xlu0 %v805
        %v807 = vpop.xlane.xlu0 %806
        %v808 = vmax.f32 %v742, %v744
        %809 = vmax.xlane.f32.xlu0 %v808
        %v810 = vpop.xlane.xlu0 %809
        %v811 = vmax.f32 %v746, %v748
        %812 = vmax.xlane.f32.xlu0 %v811
        %v813 = vpop.xlane.xlu0 %812
        %v814 = vmax.f32 %v752, %v754
        %815 = vmax.xlane.f32.xlu0 %v814
        %v816 = vpop.xlane.xlu0 %815
        %v817 = vmax.f32 %v756, %v758
        %818 = vmax.xlane.f32.xlu0 %v817
        %v819 = vpop.xlane.xlu0 %818
        %v820 = vmax.f32 %v762, %v764
        %821 = vmax.xlane.f32.xlu0 %v820
        %v822 = vpop.xlane.xlu0 %821
        %v823 = vmax.f32 %v766, %v768
        %824 = vmax.xlane.f32.xlu0 %v823
        %v825 = vpop.xlane.xlu0 %824
        %v826 = vmax.f32 %v772, %v774
        %827 = vmax.xlane.f32.xlu0 %v826
        %v828 = vpop.xlane.xlu0 %827
        %v829 = vmax.f32 %v776, %v778
        %830 = vmax.xlane.f32.xlu0 %v829
        %v831 = vpop.xlane.xlu0 %830
        %v832 = vmax.f32 %v782, %v784
        %833 = vmax.xlane.f32.xlu0 %v832
        %v834 = vpop.xlane.xlu0 %833
        %v835 = vmax.f32 %v786, %v788
        %836 = vmax.xlane.f32.xlu0 %v835
        %v837 = vpop.xlane.xlu0 %836
        %v838 = vsub.f32 %v712, %v792
        %v839 = vsub.f32 %v714, %v792
        %v840 = vsub.f32 %v716, %v795
        %v841 = vsub.f32 %v718, %v795
        %v842 = vsub.f32 %v722, %v798
        %v843 = vsub.f32 %v724, %v798
        %v844 = vsub.f32 %v726, %v801
        %v845 = vsub.f32 %v728, %v801
        %v846 = vsub.f32 %v732, %v804
        %v847 = vsub.f32 %v734, %v804
        %v848 = vsub.f32 %v736, %v807
        %v849 = vsub.f32 %v738, %v807
        %v850 = vsub.f32 %v742, %v810
        %v851 = vsub.f32 %v744, %v810
        %v852 = vsub.f32 %v746, %v813
        %v853 = vsub.f32 %v748, %v813
        %v854 = vsub.f32 %v752, %v816
        %v855 = vsub.f32 %v754, %v816
        %v856 = vsub.f32 %v756, %v819
        %v857 = vsub.f32 %v758, %v819
        %v858 = vsub.f32 %v762, %v822
        %v859 = vsub.f32 %v764, %v822
        %v860 = vsub.f32 %v766, %v825
        %v861 = vsub.f32 %v768, %v825
        %v862 = vsub.f32 %v772, %v828
        %v863 = vsub.f32 %v774, %v828
        %v864 = vsub.f32 %v776, %v831
        %v865 = vsub.f32 %v778, %v831
        %v866 = vsub.f32 %v782, %v834
        %v867 = vsub.f32 %v784, %v834
        %v868 = vsub.f32 %v786, %v837
        %v869 = vsub.f32 %v788, %v837
        %v870 = vmul.f32 %v838, 1.442695
        %v871 = vpow.pop %v870
        %v872 = vmul.f32 %v839, 1.442695
        %v873 = vpow.pop %v872
        %v874 = vmul.f32 %v840, 1.442695
        %v875 = vpow.pop %v874
        %v876 = vmul.f32 %v841, 1.442695
        %v877 = vpow.pop %v876
        %v878 = vmul.f32 %v842, 1.442695
        %v879 = vpow.pop %v878
        %v880 = vmul.f32 %v843, 1.442695
        %v881 = vpow.pop %v880
        %v882 = vmul.f32 %v844, 1.442695
        %v883 = vpow.pop %v882
        %v884 = vmul.f32 %v845, 1.442695
        %v885 = vpow.pop %v884
        %v886 = vmul.f32 %v846, 1.442695
        %v887 = vpow.pop %v886
        %v888 = vmul.f32 %v847, 1.442695
        %v889 = vpow.pop %v888
        %v890 = vmul.f32 %v848, 1.442695
        %v891 = vpow.pop %v890
        %v892 = vmul.f32 %v849, 1.442695
        %v893 = vpow.pop %v892
        %v894 = vmul.f32 %v850, 1.442695
        %v895 = vpow.pop %v894
        %v896 = vmul.f32 %v851, 1.442695
        %v897 = vpow.pop %v896
        %v898 = vmul.f32 %v852, 1.442695
        %v899 = vpow.pop %v898
        %v900 = vmul.f32 %v853, 1.442695
        %v901 = vpow.pop %v900
        %v902 = vmul.f32 %v854, 1.442695
        %v903 = vpow.pop %v902
        %v904 = vmul.f32 %v855, 1.442695
        %v905 = vpow.pop %v904
        %v906 = vmul.f32 %v856, 1.442695
        %v907 = vpow.pop %v906
        %v908 = vmul.f32 %v857, 1.442695
        %v909 = vpow.pop %v908
        %v910 = vmul.f32 %v858, 1.442695
        %v911 = vpow.pop %v910
        %v912 = vmul.f32 %v859, 1.442695
        %v913 = vpow.pop %v912
        %v914 = vmul.f32 %v860, 1.442695
        %v915 = vpow.pop %v914
        %v916 = vmul.f32 %v861, 1.442695
        %v917 = vpow.pop %v916
        %v918 = vmul.f32 %v862, 1.442695
        %v919 = vpow.pop %v918
        %v920 = vmul.f32 %v863, 1.442695
        %v921 = vpow.pop %v920
        %v922 = vmul.f32 %v864, 1.442695
        %v923 = vpow.pop %v922
        %v924 = vmul.f32 %v865, 1.442695
        %v925 = vpow.pop %v924
        %v926 = vmul.f32 %v866, 1.442695
        %v927 = vpow.pop %v926
        %v928 = vmul.f32 %v867, 1.442695
        %v929 = vpow.pop %v928
        %v930 = vmul.f32 %v868, 1.442695
        %v931 = vpow.pop %v930
        %v932 = vmul.f32 %v869, 1.442695
        %v933 = vpow.pop %v932
        %v934 = vadd.f32 %v871, %v873
        %935 = vadd.xlane.f32.xlu0 %v934
        %v936 = vpop.xlane.xlu0 %935
        %v937 = vadd.f32 %v875, %v877
        %938 = vadd.xlane.f32.xlu0 %v937
        %v939 = vpop.xlane.xlu0 %938
        %v940 = vadd.f32 %v879, %v881
        %941 = vadd.xlane.f32.xlu0 %v940
        %v942 = vpop.xlane.xlu0 %941
        %v943 = vadd.f32 %v883, %v885
        %944 = vadd.xlane.f32.xlu0 %v943
        %v945 = vpop.xlane.xlu0 %944
        %v946 = vadd.f32 %v887, %v889
        %947 = vadd.xlane.f32.xlu0 %v946
        %v948 = vpop.xlane.xlu0 %947
        %v949 = vadd.f32 %v891, %v893
        %950 = vadd.xlane.f32.xlu0 %v949
        %v951 = vpop.xlane.xlu0 %950
        %v952 = vadd.f32 %v895, %v897
        %953 = vadd.xlane.f32.xlu0 %v952
        %v954 = vpop.xlane.xlu0 %953
        %v955 = vadd.f32 %v899, %v901
        %956 = vadd.xlane.f32.xlu0 %v955
        %v957 = vpop.xlane.xlu0 %956
        %v958 = vadd.f32 %v903, %v905
        %959 = vadd.xlane.f32.xlu0 %v958
        %v960 = vpop.xlane.xlu0 %959
        %v961 = vadd.f32 %v907, %v909
        %962 = vadd.xlane.f32.xlu0 %v961
        %v963 = vpop.xlane.xlu0 %962
        %v964 = vadd.f32 %v911, %v913
        %965 = vadd.xlane.f32.xlu0 %v964
        %v966 = vpop.xlane.xlu0 %965
        %v967 = vadd.f32 %v915, %v917
        %968 = vadd.xlane.f32.xlu0 %v967
        %v969 = vpop.xlane.xlu0 %968
        %v970 = vadd.f32 %v919, %v921
        %971 = vadd.xlane.f32.xlu0 %v970
        %v972 = vpop.xlane.xlu0 %971
        %v973 = vadd.f32 %v923, %v925
        %974 = vadd.xlane.f32.xlu0 %v973
        %v975 = vpop.xlane.xlu0 %974
        %v976 = vadd.f32 %v927, %v929
        %977 = vadd.xlane.f32.xlu0 %v976
        %v978 = vpop.xlane.xlu0 %977
        %v979 = vadd.f32 %v931, %v933
        %980 = vadd.xlane.f32.xlu0 %v979
        %v981 = vpop.xlane.xlu0 %980
        %982 = vxpose.xlu0.b32.start [1/16] %v435, 128
        %983 = vxpose.xlu0.b32.cont [2/16] %v439, 128
        %984 = vxpose.xlu0.b32.cont [3/16] %v445, 128
        %985 = vxpose.xlu0.b32.cont [4/16] %v449, 128
        %986 = vxpose.xlu0.b32.cont [5/16] 0.0, 128
        %987 = vxpose.xlu0.b32.cont [6/16] 0.0, 128
        %988 = vxpose.xlu0.b32.cont [7/16] 0.0, 128
        %989 = vxpose.xlu0.b32.cont [8/16] 0.0, 128
        %990 = vxpose.xlu0.b32.cont [9/16] 0.0, 128
        %991 = vxpose.xlu0.b32.cont [10/16] 0.0, 128
        %992 = vxpose.xlu0.b32.cont [11/16] 0.0, 128
        %993 = vxpose.xlu0.b32.cont [12/16] 0.0, 128
        %994 = vxpose.xlu0.b32.cont [13/16] 0.0, 128
        %995 = vxpose.xlu0.b32.cont [14/16] 0.0, 128
        %996 = vxpose.xlu0.b32.cont [15/16] 0.0, 128
        %997 = vxpose.xlu0.b32.end [16/16] 0.0, 128
        %v998 = vpop.trf.xlu0
        %v999 = vpop.trf.xlu0
        %v1000 = vpop.trf.xlu0
        %v1001 = vpop.trf.xlu0
        %v1002 = vpop.trf.xlu0
        %v1003 = vpop.trf.xlu0
        %v1004 = vpop.trf.xlu0
        %v1005 = vpop.trf.xlu0
        %v1006 = vpop.trf.xlu0
        %v1007 = vpop.trf.xlu0
        %v1008 = vpop.trf.xlu0
        %v1009 = vpop.trf.xlu0
        %v1010 = vpop.trf.xlu0
        %v1011 = vpop.trf.xlu0
        %v1012 = vpop.trf.xlu0
        %v1013 = vpop.trf.xlu0
        %1014 = vxpose.xlu0.b32.start [1/16] %v437, 128
        %1015 = vxpose.xlu0.b32.cont [2/16] %v441, 128
        %1016 = vxpose.xlu0.b32.cont [3/16] %v447, 128
        %1017 = vxpose.xlu0.b32.cont [4/16] %v451, 128
        %1018 = vxpose.xlu0.b32.cont [5/16] 0.0, 128
        %1019 = vxpose.xlu0.b32.cont [6/16] 0.0, 128
        %1020 = vxpose.xlu0.b32.cont [7/16] 0.0, 128
        %1021 = vxpose.xlu0.b32.cont [8/16] 0.0, 128
        %1022 = vxpose.xlu0.b32.cont [9/16] 0.0, 128
        %1023 = vxpose.xlu0.b32.cont [10/16] 0.0, 128
        %1024 = vxpose.xlu0.b32.cont [11/16] 0.0, 128
        %1025 = vxpose.xlu0.b32.cont [12/16] 0.0, 128
        %1026 = vxpose.xlu0.b32.cont [13/16] 0.0, 128
        %1027 = vxpose.xlu0.b32.cont [14/16] 0.0, 128
        %1028 = vxpose.xlu0.b32.cont [15/16] 0.0, 128
        %1029 = vxpose.xlu0.b32.end [16/16] 0.0, 128
        %v1030 = vpop.trf.xlu0
        %v1031 = vpop.trf.xlu0
        %v1032 = vpop.trf.xlu0
        %v1033 = vpop.trf.xlu0
        %v1034 = vpop.trf.xlu0
        %v1035 = vpop.trf.xlu0
        %v1036 = vpop.trf.xlu0
        %v1037 = vpop.trf.xlu0
        %v1038 = vpop.trf.xlu0
        %v1039 = vpop.trf.xlu0
        %v1040 = vpop.trf.xlu0
        %v1041 = vpop.trf.xlu0
        %v1042 = vpop.trf.xlu0
        %v1043 = vpop.trf.xlu0
        %v1044 = vpop.trf.xlu0
        %v1045 = vpop.trf.xlu0
        %v1046 = vpack.c.bf16 %v999, %v998
        %v1047 = vpack.c.bf16 %v1001, %v1000
        %v1048 = vpack.c.bf16 %v1003, %v1002
        %v1049 = vpack.c.bf16 %v1005, %v1004
        %v1050 = vpack.c.bf16 %v1007, %v1006
        %v1051 = vpack.c.bf16 %v1009, %v1008
        %v1052 = vpack.c.bf16 %v1011, %v1010
        %v1053 = vpack.c.bf16 %v1013, %v1012
        %v1054 = vpack.c.bf16 %v1031, %v1030
        %v1055 = vpack.c.bf16 %v1033, %v1032
        %v1056 = vpack.c.bf16 %v1035, %v1034
        %v1057 = vpack.c.bf16 %v1037, %v1036
        %v1058 = vpack.c.bf16 %v1039, %v1038
        %v1059 = vpack.c.bf16 %v1041, %v1040
        %v1060 = vpack.c.bf16 %v1043, %v1042
        %v1061 = vpack.c.bf16 %v1045, %v1044
        %v1062 = vpack.c.bf16 %v875, %v871
        %v1063 = vpack.c.bf16 %v877, %v873
        %v1064 = vpack.c.bf16 %v883, %v879
        %v1065 = vpack.c.bf16 %v885, %v881
        %v1066 = vpack.c.bf16 %v891, %v887
        %v1067 = vpack.c.bf16 %v893, %v889
        %v1068 = vpack.c.bf16 %v899, %v895
        %v1069 = vpack.c.bf16 %v901, %v897
        %v1070 = vpack.c.bf16 %v907, %v903
        %v1071 = vpack.c.bf16 %v909, %v905
        %v1072 = vpack.c.bf16 %v915, %v911
        %v1073 = vpack.c.bf16 %v917, %v913
        %v1074 = vpack.c.bf16 %v923, %v919
        %v1075 = vpack.c.bf16 %v925, %v921
        %v1076 = vpack.c.bf16 %v931, %v927
        %v1077 = vpack.c.bf16 %v933, %v929
        %1078 = vmatprep.subr.bf16.mxu0 0
        %1079 = vmatpush1.bf16.msra.mxu0 %v1046
        %1080 = vmatprep.subr.bf16.mxu0 0
        %1081 = vmatpush1.bf16.msra.mxu0 %v1047
        %1082 = vmatprep.subr.bf16.mxu0 0
        %1083 = vmatpush1.bf16.msra.mxu0 %v1048
        %1084 = vmatprep.subr.bf16.mxu0 0
        %1085 = vmatpush1.bf16.msra.mxu0 %v1049
        %1086 = vmatprep.subr.bf16.mxu0 0
        %1087 = vmatpush1.bf16.msra.mxu0 %v1050
        %1088 = vmatprep.subr.bf16.mxu0 0
        %1089 = vmatpush1.bf16.msra.mxu0 %v1051
        %1090 = vmatprep.subr.bf16.mxu0 0
        %1091 = vmatpush1.bf16.msra.mxu0 %v1052
        %1092 = vmatprep.subr.bf16.mxu0 0
        %1093 = vmatpush1.bf16.msra.mxu0 %v1053
        %1094 = vmatprep.subr.bf16.mxu0 0
        %1095 = vmatpush1.bf16.msra.mxu0 %v1054
        %1096 = vmatprep.subr.bf16.mxu0 0
        %1097 = vmatpush1.bf16.msra.mxu0 %v1055
        %1098 = vmatprep.subr.bf16.mxu0 0
        %1099 = vmatpush1.bf16.msra.mxu0 %v1056
        %1100 = vmatprep.subr.bf16.mxu0 0
        %1101 = vmatpush1.bf16.msra.mxu0 %v1057
        %1102 = vmatprep.subr.bf16.mxu0 0
        %1103 = vmatpush1.bf16.msra.mxu0 %v1058
        %1104 = vmatprep.subr.bf16.mxu0 0
        %1105 = vmatpush1.bf16.msra.mxu0 %v1059
        %1106 = vmatprep.subr.bf16.mxu0 0
        %1107 = vmatpush1.bf16.msra.mxu0 %v1060
        %1108 = vmatprep.subr.bf16.mxu0 0
        %1109 = vmatpush1.bf16.msra.mxu0 %v1061
        %1110 = vmatprep.mubr.bf16.mxu0 %v1063
        %1111 = vmatmul.mubr.bf16.gmra.mrb[0].mxu0 %v1062
        %v1112 = vpop.f32.mrb[0].mxu0
        %v1113 = vadd.f32 0.0, %v1112
        %v1114 = vpop.f32.mrb[0].mxu0
        %v1115 = vpop.f32.mrb[0].mxu0
        %v1116 = vadd.f32 0.0, %v1115
        %v1117 = vpop.f32.mrb[0].mxu0
        %1118 = vmatprep.mubr.bf16.mxu0 %v1065
        %1119 = vmatmul.mubr.bf16.gmra.mrb[0].mxu0 %v1064
        %v1120 = vpop.f32.mrb[0].mxu0
        %v1121 = vadd.f32 0.0, %v1120
        %v1122 = vpop.f32.mrb[0].mxu0
        %v1123 = vpop.f32.mrb[0].mxu0
        %v1124 = vadd.f32 0.0, %v1123
        %v1125 = vpop.f32.mrb[0].mxu0
        %1126 = vmatprep.mubr.bf16.mxu0 %v1067
        %1127 = vmatmul.mubr.bf16.gmra.mrb[0].mxu0 %v1066
        %v1128 = vpop.f32.mrb[0].mxu0
        %v1129 = vadd.f32 0.0, %v1128
        %v1130 = vpop.f32.mrb[0].mxu0
        %v1131 = vpop.f32.mrb[0].mxu0
        %v1132 = vadd.f32 0.0, %v1131
        %v1133 = vpop.f32.mrb[0].mxu0
        %1134 = vmatprep.mubr.bf16.mxu0 %v1069
        %1135 = vmatmul.mubr.bf16.gmra.mrb[0].mxu0 %v1068
        %v1136 = vpop.f32.mrb[0].mxu0
        %v1137 = vadd.f32 0.0, %v1136
        %v1138 = vpop.f32.mrb[0].mxu0
        %v1139 = vpop.f32.mrb[0].mxu0
        %v1140 = vadd.f32 0.0, %v1139
        %v1141 = vpop.f32.mrb[0].mxu0
        %1142 = vmatprep.mubr.bf16.mxu0 %v1071
        %1143 = vmatmul.mubr.bf16.gmra.mrb[0].mxu0 %v1070
        %v1144 = vpop.f32.mrb[0].mxu0
        %v1145 = vadd.f32 0.0, %v1144
        %v1146 = vpop.f32.mrb[0].mxu0
        %v1147 = vpop.f32.mrb[0].mxu0
        %v1148 = vadd.f32 0.0, %v1147
        %v1149 = vpop.f32.mrb[0].mxu0
        %1150 = vmatprep.mubr.bf16.mxu0 %v1073
        %1151 = vmatmul.mubr.bf16.gmra.mrb[0].mxu0 %v1072
        %v1152 = vpop.f32.mrb[0].mxu0
        %v1153 = vadd.f32 0.0, %v1152
        %v1154 = vpop.f32.mrb[0].mxu0
        %v1155 = vpop.f32.mrb[0].mxu0
        %v1156 = vadd.f32 0.0, %v1155
        %v1157 = vpop.f32.mrb[0].mxu0
        %1158 = vmatprep.mubr.bf16.mxu0 %v1075
        %1159 = vmatmul.mubr.bf16.gmra.mrb[0].mxu0 %v1074
        %v1160 = vpop.f32.mrb[0].mxu0
        %v1161 = vadd.f32 0.0, %v1160
        %v1162 = vpop.f32.mrb[0].mxu0
        %v1163 = vpop.f32.mrb[0].mxu0
        %v1164 = vadd.f32 0.0, %v1163
        %v1165 = vpop.f32.mrb[0].mxu0
        %1166 = vmatprep.mubr.bf16.mxu0 %v1077
        %1167 = vmatmul.mubr.bf16.gmra.mrb[0].mxu0 %v1076
        %v1168 = vpop.f32.mrb[0].mxu0
        %v1169 = vadd.f32 0.0, %v1168
        %v1170 = vpop.f32.mrb[0].mxu0
        %v1171 = vpop.f32.mrb[0].mxu0
        %v1172 = vadd.f32 0.0, %v1171
        %v1173 = vpop.f32.mrb[0].mxu0
        %1174 = vdwg.mxu0
        %s1175 = sld [smem:[#allocation2]]
        %v1176 = vrcp.pop %v936
        %v1177 = vrcp.pop %v939
        %v1178 = vrcp.pop %v942
        %v1179 = vrcp.pop %v945
        %v1180 = vrcp.pop %v948
        %v1181 = vrcp.pop %v951
        %v1182 = vrcp.pop %v954
        %v1183 = vrcp.pop %v957
        %v1184 = vrcp.pop %v960
        %v1185 = vrcp.pop %v963
        %v1186 = vrcp.pop %v966
        %v1187 = vrcp.pop %v969
        %v1188 = vrcp.pop %v972
        %v1189 = vrcp.pop %v975
        %v1190 = vrcp.pop %v978
        %v1191 = vrcp.pop %v981
        %v1192 = vstv %s1175
        %v1193 = vmul.f32 %v1192, %v1176
        %v1194 = vmul.f32 %v1192, %v1177
        %v1195 = vmul.f32 %v1192, %v1178
        %v1196 = vmul.f32 %v1192, %v1179
        %v1197 = vmul.f32 %v1192, %v1180
        %v1198 = vmul.f32 %v1192, %v1181
        %v1199 = vmul.f32 %v1192, %v1182
        %v1200 = vmul.f32 %v1192, %v1183
        %v1201 = vmul.f32 %v1192, %v1184
        %v1202 = vmul.f32 %v1192, %v1185
        %v1203 = vmul.f32 %v1192, %v1186
        %v1204 = vmul.f32 %v1192, %v1187
        %v1205 = vmul.f32 %v1192, %v1188
        %v1206 = vmul.f32 %v1192, %v1189
        %v1207 = vmul.f32 %v1192, %v1190
        %v1208 = vmul.f32 %v1192, %v1191
        %v1209 = vmul.f32 %v1113, %v1193
        %v1210 = vmul.f32 %v1116, %v1194
        %v1211 = vmul.f32 %v1121, %v1195
        %v1212 = vmul.f32 %v1124, %v1196
        %v1213 = vmul.f32 %v1129, %v1197
        %v1214 = vmul.f32 %v1132, %v1198
        %v1215 = vmul.f32 %v1137, %v1199
        %v1216 = vmul.f32 %v1140, %v1200
        %v1217 = vmul.f32 %v1145, %v1201
        %v1218 = vmul.f32 %v1148, %v1202
        %v1219 = vmul.f32 %v1153, %v1203
        %v1220 = vmul.f32 %v1156, %v1204
        %v1221 = vmul.f32 %v1161, %v1205
        %v1222 = vmul.f32 %v1164, %v1206
        %v1223 = vmul.f32 %v1169, %v1207
        %v1224 = vmul.f32 %v1172, %v1208
        %1225 = vxpose.xlu0.b32.start [1/16] %v1209, 128
        %1226 = vxpose.xlu0.b32.cont [2/16] %v1210, 128
        %1227 = vxpose.xlu0.b32.cont [3/16] %v1211, 128
        %1228 = vxpose.xlu0.b32.cont [4/16] %v1212, 128
        %1229 = vxpose.xlu0.b32.cont [5/16] %v1213, 128
        %1230 = vxpose.xlu0.b32.cont [6/16] %v1214, 128
        %1231 = vxpose.xlu0.b32.cont [7/16] %v1215, 128
        %1232 = vxpose.xlu0.b32.cont [8/16] %v1216, 128
        %1233 = vxpose.xlu0.b32.cont [9/16] %v1217, 128
        %1234 = vxpose.xlu0.b32.cont [10/16] %v1218, 128
        %1235 = vxpose.xlu0.b32.cont [11/16] %v1219, 128
        %1236 = vxpose.xlu0.b32.cont [12/16] %v1220, 128
        %1237 = vxpose.xlu0.b32.cont [13/16] %v1221, 128
        %1238 = vxpose.xlu0.b32.cont [14/16] %v1222, 128
        %1239 = vxpose.xlu0.b32.cont [15/16] %v1223, 128
        %1240 = vxpose.xlu0.b32.end [16/16] %v1224, 128
        %v1241 = vpop.trf.xlu0
        %v1242 = vpop.trf.xlu0
        %v1243 = vpop.trf.xlu0
        %v1244 = vpop.trf.xlu0
        %v1245 = vpop.trf.xlu0
        %v1246 = vpop.trf.xlu0
        %v1247 = vpop.trf.xlu0
        %v1248 = vpop.trf.xlu0
        %v1249 = vpop.trf.xlu0
        %v1250 = vpop.trf.xlu0
        %v1251 = vpop.trf.xlu0
        %v1252 = vpop.trf.xlu0
        %v1253 = vpop.trf.xlu0
        %v1254 = vpop.trf.xlu0
        %v1255 = vpop.trf.xlu0
        %v1256 = vpop.trf.xlu0
        %v1257 = vadd.f32 %v1241, %v344
        %v1258 = vadd.f32 %v1242, %v345
        %v1259 = vadd.f32 %v1243, %v346
        %v1260 = vadd.f32 %v1244, %v347
        %1261 = vst [vmem:[%s329] sm:$0xff] %v1257
        %1262 = vst [vmem:[%s329 + $0x8] sm:$0xff] %v1258
        %1263 = vst [vmem:[%s329 + $0x10] sm:$0xff] %v1259
        %1264 = vst [vmem:[%s329 + $0x18] sm:$0xff] %v1260
        %s1265 = sand.u32 %s206, 1
        %s1266 = scalar_lea.sflag [#allocation5], %s1265
        %s1267 = sand.u32 %s206, 1
        %s1268 = smul.addr %s1267, 32
        %s1269 = scalar_lea.vmem [#allocation6], %s1268
        // Predicated region
        $region53: #{tpu_custom_call.1} parent=47 // pred_check
          %p1270 = pneg %p216
        $region54: #{tpu_custom_call.1} parent=47 // pred_check_branch
          %1272 = sbr.rel (%p1270) target = $region56
        $region55: #{tpu_custom_call.1} parent=47 // pred_region
          %s1274 = ssub.s32 512, 512
          %1275 = vsyncadd %s1266, %s1274
          %s1276 = smul.addr %s29, 8
          %s1277 = sadd.s32 %s30, %s1276
          %s1278 = smul.addr %s1277, 128
          %s1279 = scalar_lea.hbm %s7, %s1278
          %s1280 = sshll.u32 %s1269, 4
          %s1281 = int_to_ptr.vmem [resolvable:$true] %s1280
          %1286 = dma.vmem_to_hbm [thread:$0]  %s1281, 512, %s1279, %s1266, 128, 256, 8
        $region56: #{tpu_custom_call.1} parent=47 // pred_fallthru
          _
      $region48: #{tpu_custom_call.1} parent=5 // pred_fallthru
        _
      %p1287 = scmp.le.s32.totalorder 2, %s20
      // Predicated region
      $region57: #{tpu_custom_call.1} parent=5 // pred_check
        %p1288 = pneg %p1287
      $region58: #{tpu_custom_call.1} parent=5 // pred_check_branch
        %1290 = sbr.rel (%p1288) target = $region60
      $region59: #{tpu_custom_call.1} parent=5 // pred_region
        %s1291 = ssub.s32 %s20, 2
        // Predicated region
        $region61: #{tpu_custom_call.1} parent=59 // pred_check
          %p1292 = pneg %p222
        $region62: #{tpu_custom_call.1} parent=59 // pred_check_branch
          %1294 = sbr.rel (%p1292) target = $region64
        $region63: #{tpu_custom_call.1} parent=59 // pred_region
          %s1295 = sand.u32 %s207, 1
          %s1296 = scalar_lea.sflag [#allocation5], %s1295
          %s1297 = sand.u32 %s207, 1
          %s1298 = smul.addr %s1297, 32
          %s1299 = scalar_lea.vmem [#allocation6], %s1298
          %1300 = dma.done %s1296, 512
        $region64: #{tpu_custom_call.1} parent=59 // pred_fallthru
          _
      $region60: #{tpu_custom_call.1} parent=5 // pred_fallthru
        _
    $region6: #{tpu_custom_call.1} parent=1 // loop_footer
      %s24 = sadd.s32 1, %s20
    $region7: #{tpu_custom_call.1} parent=1 // loop_footer_branch
      %19 = sbr.rel target = $region3
    $region8: #{tpu_custom_call.1} parent=1 // loop_exit
      _
    %1301 = vsyncpa [#allocation4], 1
    %s1302 = scalar_lea.sflag [#allocation4], 1
    %1303 = vsyncpa %s1302, 1
    %1304 = vsyncpa [#allocation5], 1
    %s1305 = scalar_lea.sflag [#allocation5], 1
    %1306 = vsyncpa %s1305, 1

</llo_original>
